<compile_context>
chip_gen: v7x
topology: tpu7x:2x2x1
jax: 0.10.0
libtpu: 0.0.40
codegen_flags: <defaults>
</compile_context>

<pallas_src>
import functools
import math

import jax
import jax.numpy as jnp
import numpy as np
from jax.experimental import pallas as pl
from jax.experimental.pallas import tpu as pltpu

_LANE = 128
_SUBLANE = 8
# Per-block VMEM cap.  Pallas double-buffers input and output blocks, so the
# resident footprint is ~4x this -> <= 8 MiB, safe on all TPU generations
# without raising the scoped-VMEM limit.
_MAX_BLOCK_BYTES = 2 * 1024 * 1024


def _copy_kernel(src_ref, out_ref):
    # Identity pass-through of the current (TM, cols) tile.
    out_ref[...] = src_ref[...]


def _choose_2d_layout(total: int, last_dim: int):
    """Pick a lane-dense (rows, cols) factorization of `total` elements."""
    for cols in (2048, 1024, 512, 256, 128):
        if total % cols == 0:
            return total // cols, cols
    # TODO(synk): element counts not divisible by 128 fall back to the original
    # trailing dim (may emit masked stores); still bit-exact.
    return total // last_dim, last_dim


def _identity_copy_2d(x2d: jnp.ndarray) -> jnp.ndarray:
    rows, cols = x2d.shape
    itemsize = x2d.dtype.itemsize

    full_bytes = rows * cols * itemsize
    if full_bytes <= _MAX_BLOCK_BYTES or rows <= _SUBLANE:
        # Small enough (or too few rows to tile): one full-extent block.
        tm = rows
    else:
        # Row tile: multiple of 8 sublanes, capped by the per-block VMEM budget.
        tm = (_MAX_BLOCK_BYTES // (cols * itemsize)) // _SUBLANE * _SUBLANE
        tm = max(_SUBLANE, min(rows, tm))

    grid = (pl.cdiv(rows, tm),)

    return pl.pallas_call(
        _copy_kernel,
        out_shape=jax.ShapeDtypeStruct((rows, cols), x2d.dtype),
        grid_spec=pltpu.PrefetchScalarGridSpec(
            num_scalar_prefetch=0,
            grid=grid,
            in_specs=[pl.BlockSpec((tm, cols), lambda i: (i, 0))],
            out_specs=pl.BlockSpec((tm, cols), lambda i: (i, 0)),
        ),
        compiler_params=pltpu.CompilerParams(
            dimension_semantics=("parallel",),
        ),
        # Output aliases the input buffer: no second HBM allocation.
        input_output_aliases={0: 0},
    )(x2d)


@functools.partial(jax.jit, donate_argnums=(0,))
def encoder_forward(src: jnp.ndarray) -> jnp.ndarray:
    """Pallas implementation of Encoder.forward(src): identity pass-through.

    src: (batch, seq, hidden) (any shape/dtype is accepted)
    returns: array with the same shape/dtype, bit-identical to src.
    """
    orig_shape = src.shape
    total = math.prod(orig_shape) if orig_shape else 1
    last_dim = orig_shape[-1] if orig_shape else 1

    rows, cols = _choose_2d_layout(total, last_dim)
    x2d = src.reshape(rows, cols)          # lane-dense 2D slab (bitcast, no copy)
    y2d = _identity_copy_2d(x2d)
    return y2d.reshape(orig_shape)


if __name__ == "__main__":
    key = jax.random.PRNGKey(0)
    batch, seq, hidden = 2, 8, 32
    src = jax.random.normal(key, (batch, seq, hidden), dtype=jnp.float32)

    # Host-side copy of the expected result (src is donated to the kernel).
    expected = np.asarray(src)

    out = encoder_forward(src)
    out = jax.block_until_ready(out)

    # Identity semantics check.
    assert out.shape == expected.shape
    assert out.dtype == expected.dtype
    assert np.array_equal(np.asarray(out), expected)

    print("KERNEL_OK")
</pallas_src>

<mosaic_0001>
module attributes {stable_mosaic.version = 11 : i64} {
  func.func @_copy_kernel(%arg0: i32, %arg1: memref<1x512xf32, #tpu.memory_space<vmem>>, %arg2: memref<1x512xf32, #tpu.memory_space<vmem>>) attributes {dimension_semantics = [#tpu.dimension_semantics<parallel>], iteration_bounds = array<i64: 1>, scalar_prefetch = 0 : i64, scratch_operands = 0 : i64, tpu.core_type = #tpu.core_type<tc>, window_params = [{transform_indices = @transform_0, window_bounds = array<i64: 1, 512>}, {transform_indices = @transform_1, window_bounds = array<i64: 1, 512>}]} {
    %c0 = arith.constant 0 : index
    %c0_0 = arith.constant 0 : index
    %0 = vector.load %arg1[%c0, %c0_0] : memref<1x512xf32, #tpu.memory_space<vmem>>, vector<1x512xf32>
    %c0_1 = arith.constant 0 : index
    %c0_2 = arith.constant 0 : index
    %1 = vector.load %arg2[%c0_1, %c0_2] : memref<1x512xf32, #tpu.memory_space<vmem>>, vector<1x512xf32>
    tpu.vector_store %arg2[%c0_1, %c0_2], %0 {strides = array<i32>} : memref<1x512xf32, #tpu.memory_space<vmem>>, vector<1x512xf32>,
    return
  }
  func.func @transform_0(%arg0: i32) -> (i32, i32) {
    %c0_i32 = arith.constant 0 : i32
    %c0_i32_0 = arith.constant 0 : i32
    return %arg0, %c0_i32 : i32, i32
  }
  func.func @transform_1(%arg0: i32) -> (i32, i32) {
    %c0_i32 = arith.constant 0 : i32
    %c0_i32_0 = arith.constant 0 : i32
    return %arg0, %c0_i32 : i32, i32
  }
}

</mosaic_0001>

<llo_original>
// kernel: encoder_forward.1
$region0: #{encoder_forward.1}
  #allocation0 [shape = 'u32[]', space=smem, size = 0x4, offset = 0x4, fixed_abs, tag = 'smem constant byte address 0x4 - core index']
  #allocation1 [shape = 'u32[144,128]{1,0:T(1,128)}', space=vmem, size = 0x12000, scoped, tag = 'internal scratch']
  %s0 = inlined_call_operand.vmem [shape: f32[1,512], index: 0, kind: input, shape index: {}, may-alias: {0,1}]
  %s1 = inlined_call_operand.vmem [shape: f32[1,512], index: 1, kind: output, shape index: {}, may-alias: {0,1}]
  %s2 = sld [smem:[#allocation0]]
  $region14: #{encoder_forward.1} parent=0
    _
  %s4 = ssub.s32 1, %s2
  %s5 = scalar_select 0, %s4, %s2
  // Predicated region
  $region2: #{encoder_forward.1} parent=0 // pred_check
    _
  $region3: #{encoder_forward.1} parent=0 // pred_check_branch
    %7 = sbr.rel (0) target = $region5
  $region4: #{encoder_forward.1} parent=0 // pred_region
    _
  $region5: #{encoder_forward.1} parent=0 // pred_fallthru
    _
  %v8 = vld [vmem:[%s0] sm:$0xf]
  %v9 = vlaneseq
  %vm10 = vcmp.ge.s32.totalorder %v9, 0
  %vm11 = vcmp.lt.s32.totalorder %v9, 512
  %vm12 = vmand %vm10, %vm11
  %13 = vst.msk [vmem:[%s1] sm:$0xf] %vm12, %v8
  // Predicated region
  $region6: #{encoder_forward.1} parent=0 // pred_check
    _
  $region7: #{encoder_forward.1} parent=0 // pred_check_branch
    %15 = sbr.rel (0) target = $region9
  $region8: #{encoder_forward.1} parent=0 // pred_region
    _
  $region9: #{encoder_forward.1} parent=0 // pred_fallthru
    _
  // Predicated region
  $region10: #{encoder_forward.1} parent=0 // pred_check
    _
  $region11: #{encoder_forward.1} parent=0 // pred_check_branch
    %17 = sbr.rel (0) target = $region13
  $region12: #{encoder_forward.1} parent=0 // pred_region
    _
  $region13: #{encoder_forward.1} parent=0 // pred_fallthru
    _

</llo_original>
